<compile_context>
chip_gen: v6e
topology: v6e:2x2x1
jax: 0.10.0
libtpu: 0.0.40
codegen_flags: <defaults>
</compile_context>

<pallas_src>
import math

import jax
import jax.numpy as jnp
from jax import lax
from jax.experimental import pallas as pl
from jax.experimental.pallas import tpu as pltpu


def _round_up(x, m):
    return ((x + m - 1) // m) * m


def _fc_kernel(x_ref, w_ref, b_ref, o_ref, acc_ref):
    """One (tm, tn) output tile; feature axis (K) streamed on grid axis 2.

    x_ref:   (tm, tk)  activation tile
    w_ref:   (tn, tk)  weight tile, native PyTorch (C, F) layout
    b_ref:   (1, tn)   bias tile (same block across the K axis)
    o_ref:   (tm, tn)  output tile
    acc_ref: (tm, tn)  f32 VMEM accumulator scratch
    """
    k = pl.program_id(2)

    @pl.when(k == 0)
    def _():
        acc_ref[...] = jnp.zeros_like(acc_ref)

    # (tm, tk) x (tn, tk) contracted over the feature axis -> (tm, tn).
    acc_ref[...] += lax.dot_general(
        x_ref[...],
        w_ref[...],
        dimension_numbers=(((1,), (1,)), ((), ())),
        preferred_element_type=jnp.float32,
    )

    @pl.when(k == pl.num_programs(2) - 1)
    def _():
        o_ref[...] = (
            acc_ref[...] + b_ref[...].astype(jnp.float32)
        ).astype(o_ref.dtype)


def _fc_kernel_single_k(x_ref, w_ref, b_ref, o_ref):
    """Whole feature axis fits in one tile: fuse matmul + bias, no scratch."""
    o_ref[...] = (
        lax.dot_general(
            x_ref[...],
            w_ref[...],
            dimension_numbers=(((1,), (1,)), ((), ())),
            preferred_element_type=jnp.float32,
        )
        + b_ref[...].astype(jnp.float32)
    ).astype(o_ref.dtype)


def fc_forward(x, weight, bias, *, tm=256, tn=256, tk=512, compute_dtype=None):
    """FC head forward: y = x @ weight.T + bias  (eval-mode dropout = identity).

    x:      (B, F) float
    weight: (C, F) float  -- native PyTorch nn.Linear layout
    bias:   (C,)   float
    compute_dtype: optional dtype (e.g. jnp.bfloat16) for x/weight streaming;
                   accumulation stays in f32, output is f32.
    """
    B, F = x.shape
    C = weight.shape[0]
    out_dtype = jnp.float32

    if compute_dtype is not None:
        x = x.astype(compute_dtype)
        weight = weight.astype(compute_dtype)
    in_itemsize = jnp.dtype(x.dtype).itemsize

    # Clamp tiles to (padded) problem size; keep TPU tiling alignment:
    #   tm multiple of 8 (sublane), tn/tk multiples of 128 (lane).
    tm = min(tm, _round_up(B, 8))
    tn = min(tn, _round_up(C, 128))
    tk = min(tk, _round_up(F, 128))

    Bp = _round_up(B, tm)
    Cp = _round_up(C, tn)
    Fp = _round_up(F, tk)

    # Zero padding is semantically safe: padded F columns contribute 0 to the
    # dot product, padded C/B rows are sliced off below. Only copy when needed.
    xp = x if (Bp == B and Fp == F) else jnp.pad(x, ((0, Bp - B), (0, Fp - F)))
    wp = weight if (Cp == C and Fp == F) else jnp.pad(
        weight, ((0, Cp - C), (0, Fp - F))
    )
    bias_f32 = bias.astype(jnp.float32)
    bp = (
        bias_f32 if Cp == C else jnp.pad(bias_f32, (0, Cp - C))
    ).reshape(1, Cp)

    n_k = Fp // tk
    single_k = n_k == 1

    # VMEM budget: double-buffered x/w/bias/out tiles (+ f32 accumulator when
    # the K axis is tiled), with 2x headroom, clamped to stay safe on v7x
    # (64 MiB physical VMEM).
    vmem_bytes = (
        2 * (tm * tk + tn * tk) * in_itemsize   # x + w double buffers
        + 2 * tn * 4                            # bias double buffer
        + 2 * tm * tn * 4                       # output double buffer
        + (0 if single_k else tm * tn * 4)      # accumulator scratch
    )
    vmem_limit = min(max(2 * vmem_bytes, 16 * 1024 * 1024), 64 * 1024 * 1024)

    cost = pl.CostEstimate(
        flops=2 * B * F * C,
        transcendentals=0,
        bytes_accessed=(B * F + C * F) * in_itemsize + C * 4 + B * C * 4,
    )

    if single_k:
        grid = (Bp // tm, Cp // tn)
        grid_spec = pltpu.PrefetchScalarGridSpec(
            num_scalar_prefetch=0,
            grid=grid,
            in_specs=[
                pl.BlockSpec((tm, tk), lambda i, j: (i, 0)),   # x
                pl.BlockSpec((tn, tk), lambda i, j: (j, 0)),   # weight (C, F)
                pl.BlockSpec((1, tn), lambda i, j: (0, j)),    # bias
            ],
            out_specs=pl.BlockSpec((tm, tn), lambda i, j: (i, j)),
        )
        kernel = _fc_kernel_single_k
        dim_sem = ("parallel", "parallel")
    else:
        grid = (Bp // tm, Cp // tn, n_k)
        grid_spec = pltpu.PrefetchScalarGridSpec(
            num_scalar_prefetch=0,
            grid=grid,
            in_specs=[
                pl.BlockSpec((tm, tk), lambda i, j, k: (i, k)),   # x
                pl.BlockSpec((tn, tk), lambda i, j, k: (j, k)),   # weight (C, F)
                pl.BlockSpec((1, tn), lambda i, j, k: (0, j)),    # bias, K-resident
            ],
            out_specs=pl.BlockSpec((tm, tn), lambda i, j, k: (i, j)),
            scratch_shapes=[pltpu.VMEM((tm, tn), jnp.float32)],
        )
        kernel = _fc_kernel
        dim_sem = ("parallel", "parallel", "arbitrary")

    out = pl.pallas_call(
        kernel,
        out_shape=jax.ShapeDtypeStruct((Bp, Cp), out_dtype),
        grid_spec=grid_spec,
        compiler_params=pltpu.CompilerParams(
            dimension_semantics=dim_sem,
            vmem_limit_bytes=int(vmem_limit),
        ),
        cost_estimate=cost,
    )(xp, wp, bp)

    if Bp == B and Cp == C:
        return out
    return out[:B, :C]


def fc_forward_auto(x, weight, bias, **kw):
    """Dispatch: for sub-tile problems the fused XLA op beats any Pallas call."""
    B, F = x.shape
    C = weight.shape[0]
    if B * F * C < (128 * 128 * 128):
        return x @ weight.T + bias
    return fc_forward(x, weight, bias, **kw)


if __name__ == "__main__":
    key = jax.random.PRNGKey(0)

    def make_params(k, batch, n_features, num_class):
        kx, kw, kb = jax.random.split(k, 3)
        x = jax.random.normal(kx, (batch, n_features), dtype=jnp.float32)
        # FC.__init__ semantics: W ~ N(0, sqrt(2/num_class)),
        # b ~ U(-1/sqrt(F), 1/sqrt(F)) (PyTorch Linear default bias init).
        w = jax.random.normal(kw, (num_class, n_features), dtype=jnp.float32) * math.sqrt(
            2.0 / num_class
        )
        bound = 1.0 / math.sqrt(n_features)
        b = jax.random.uniform(
            kb, (num_class,), dtype=jnp.float32, minval=-bound, maxval=bound
        )
        return x, w, b

    # Case 1: tiny shapes matching the module's forward signature (B, F).
    x1, w1, b1 = make_params(key, 8, 32, 16)
    out1 = jax.block_until_ready(fc_forward(x1, w1, b1))
    ref1 = x1 @ w1.T + b1
    assert out1.shape == (8, 16)
    assert jnp.allclose(out1, ref1, atol=1e-5, rtol=1e-5)

    # Case 2: multi-tile grid (exercises K reduction + accumulator + padding).
    x2, w2, b2 = make_params(jax.random.PRNGKey(1), 384, 640, 384)
    out2 = jax.block_until_ready(fc_forward(x2, w2, b2, tm=128, tn=128, tk=256))
    ref2 = x2 @ w2.T + b2
    assert jnp.allclose(out2, ref2, atol=1e-4, rtol=1e-4)

    # Case 3: bf16 streaming path (halves HBM traffic; f32 accumulation kept).
    out3 = jax.block_until_ready(
        fc_forward(x2, w2, b2, tm=128, tn=128, tk=256, compute_dtype=jnp.bfloat16)
    )
    x2b = x2.astype(jnp.bfloat16).astype(jnp.float32)
    w2b = w2.astype(jnp.bfloat16).astype(jnp.float32)
    ref3 = x2b @ w2b.T + b2
    assert jnp.allclose(out3, ref3, atol=1e-3, rtol=1e-3)

    # Case 4: single-K fused kernel (whole feature axis in one tile).
    x4, w4, b4 = make_params(jax.random.PRNGKey(2), 256, 256, 256)
    out4 = jax.block_until_ready(fc_forward(x4, w4, b4))
    ref4 = x4 @ w4.T + b4
    assert jnp.allclose(out4, ref4, atol=1e-4, rtol=1e-4)

    # Case 5: auto dispatch (tiny -> plain XLA fusion, large -> Pallas kernel).
    out5 = jax.block_until_ready(fc_forward_auto(x1, w1, b1))
    assert jnp.allclose(out5, ref1, atol=1e-5, rtol=1e-5)

    print("KERNEL_OK")
</pallas_src>

<mosaic_0001>
module attributes {stable_mosaic.version = 11 : i64} {
  func.func @_fc_kernel_single_k(%arg0: i32, %arg1: i32, %arg2: memref<8x128xf32, #tpu.memory_space<vmem>>, %arg3: memref<128x128xf32, #tpu.memory_space<vmem>>, %arg4: memref<1x128xf32, #tpu.memory_space<vmem>>, %arg5: memref<8x128xf32, #tpu.memory_space<vmem>>) attributes {dimension_semantics = [#tpu.dimension_semantics<parallel>, #tpu.dimension_semantics<parallel>], iteration_bounds = array<i64: 1, 1>, scalar_prefetch = 0 : i64, scratch_operands = 0 : i64, tpu.core_type = #tpu.core_type<tc>, window_params = [{transform_indices = @transform_0, window_bounds = array<i64: 8, 128>}, {transform_indices = @transform_1, window_bounds = array<i64: 128, 128>}, {transform_indices = @transform_2, window_bounds = array<i64: 1, 128>}, {transform_indices = @transform_3, window_bounds = array<i64: 8, 128>}]} {
    %c0 = arith.constant 0 : index
    %c0_0 = arith.constant 0 : index
    %0 = vector.load %arg2[%c0, %c0_0] : memref<8x128xf32, #tpu.memory_space<vmem>>, vector<8x128xf32>
    %c0_1 = arith.constant 0 : index
    %c0_2 = arith.constant 0 : index
    %1 = vector.load %arg3[%c0_1, %c0_2] : memref<128x128xf32, #tpu.memory_space<vmem>>, vector<128x128xf32>
    %cst = arith.constant dense<0.000000e+00> : vector<8x128xf32>
    %2 = tpu.matmul %0, %1, %cst {dimension_numbers = #tpu.dot_dimension_numbers<[1], [1], [0], [0], [0, 0, 1, 0], [], []>} : vector<8x128xf32>, vector<128x128xf32>, vector<8x128xf32> -> vector<8x128xf32>
    %c0_3 = arith.constant 0 : index
    %c0_4 = arith.constant 0 : index
    %3 = vector.load %arg4[%c0_3, %c0_4] : memref<1x128xf32, #tpu.memory_space<vmem>>, vector<1x128xf32>
    %4 = vector.broadcast %3 : vector<1x128xf32> to vector<8x128xf32>
    %5 = arith.addf %2, %4 : vector<8x128xf32>
    %c0_5 = arith.constant 0 : index
    %c0_6 = arith.constant 0 : index
    %6 = vector.load %arg5[%c0_5, %c0_6] : memref<8x128xf32, #tpu.memory_space<vmem>>, vector<8x128xf32>
    tpu.vector_store %arg5[%c0_5, %c0_6], %5 {strides = array<i32>} : memref<8x128xf32, #tpu.memory_space<vmem>>, vector<8x128xf32>,
    return
  }
  func.func @transform_0(%arg0: i32, %arg1: i32) -> (i32, i32) {
    %c0_i32 = arith.constant 0 : i32
    %c0_i32_0 = arith.constant 0 : i32
    return %arg0, %c0_i32 : i32, i32
  }
  func.func @transform_1(%arg0: i32, %arg1: i32) -> (i32, i32) {
    %c0_i32 = arith.constant 0 : i32
    %c0_i32_0 = arith.constant 0 : i32
    return %arg1, %c0_i32 : i32, i32
  }
  func.func @transform_2(%arg0: i32, %arg1: i32) -> (i32, i32) {
    %c0_i32 = arith.constant 0 : i32
    %c0_i32_0 = arith.constant 0 : i32
    return %c0_i32, %arg1 : i32, i32
  }
  func.func @transform_3(%arg0: i32, %arg1: i32) -> (i32, i32) {
    %c0_i32 = arith.constant 0 : i32
    return %arg0, %arg1 : i32, i32
  }
}

</mosaic_0001>

<llo_original>
// kernel: tpu_custom_call.1
$region0: #{tpu_custom_call.1}
  #allocation0 [shape = 'u32[]', space=smem, size = 0x4, offset = 0x4, fixed_abs, tag = 'smem constant byte address 0x4 - core index']
  #allocation1 [shape = 'u32[144,128]{1,0:T(1,128)}', space=vmem, size = 0x12000, scoped, tag = 'internal scratch']
  %s0 = inlined_call_operand.hbm [shape: f32[8,128], index: 0, kind: input, shape index: {}]
  %s1 = inlined_call_operand.hbm [shape: f32[128,128], index: 1, kind: input, shape index: {}]
  %s2 = inlined_call_operand.vmem [shape: f32[1,128], index: 2, kind: input, shape index: {}]
  %s3 = inlined_call_operand.hbm [shape: f32[8,128], index: 3, kind: output, shape index: {}]
  %s4 = sld [smem:[#allocation0]]
  $region30: #{tpu_custom_call.1} parent=0
    _
  %s6 = ssub.s32 1, %s4
  %s7 = scalar_select 0, %s6, %s4
  $region1: #{tpu_custom_call.1} parent=0
    #allocation2 [shape = 'u8[4096]{0}', space=vmem, size = 0x1000, scoped, tag = 'input window, operand 0, single buffered']
    #allocation3 [shape = 's32[1]{0}', space=sflag, size = 0x4, scoped, tag = 'scoped memory for tpu_custom_call.1']
    #allocation4 [shape = 's32[1]{0}', space=sflag, size = 0x4, scoped, tag = 'scoped memory for tpu_custom_call.1']
    #allocation5 [shape = 'u8[65536]{0}', space=vmem, size = 0x10000, scoped, tag = 'input window, operand 1, single buffered']
    #allocation6 [shape = 's32[1]{0}', space=sflag, size = 0x4, scoped, tag = 'scoped memory for tpu_custom_call.1']
    #allocation7 [shape = 'u8[4096]{0}', space=vmem, size = 0x1000, scoped, tag = 'output window, operand 0, single buffered']
    %8 = vsyncpa [#allocation3], 0
    %9 = vsyncpa [#allocation6], 0
    %10 = vsyncpa [#allocation4], 0
    // Predicated region
    $region2: #{tpu_custom_call.1} parent=1 // pred_check
      _
    $region3: #{tpu_custom_call.1} parent=1 // pred_check_branch
      %12 = sbr.rel (0) target = $region5
    $region4: #{tpu_custom_call.1} parent=1 // pred_region
      %s14 = ssub.s32 128, 128
      %15 = vsyncadd [#allocation3], %s14
      %s17 = sshll.u32 [#allocation2], 4
      %s18 = int_to_ptr.vmem [resolvable:$true] %s17
      %20 = dma.hbm_to_vmem [thread:$0]  %s0, 128, %s18, [#allocation3]
    $region5: #{tpu_custom_call.1} parent=1 // pred_fallthru
      _
    // Predicated region
    $region6: #{tpu_custom_call.1} parent=1 // pred_check
      _
    $region7: #{tpu_custom_call.1} parent=1 // pred_check_branch
      %22 = sbr.rel (0) target = $region9
    $region8: #{tpu_custom_call.1} parent=1 // pred_region
      %s24 = ssub.s32 2048, 2048
      %25 = vsyncadd [#allocation6], %s24
      %s26 = sshll.u32 [#allocation5], 4
      %s27 = int_to_ptr.vmem [resolvable:$true] %s26
      %32 = dma.hbm_to_vmem [thread:$0]  %s1, 2048, %s27, [#allocation6], 128, 128, 8
    $region9: #{tpu_custom_call.1} parent=1 // pred_fallthru
      _
    // Predicated region
    $region10: #{tpu_custom_call.1} parent=1 // pred_check
      _
    $region11: #{tpu_custom_call.1} parent=1 // pred_check_branch
      %34 = sbr.rel (0) target = $region13
    $region12: #{tpu_custom_call.1} parent=1 // pred_region
      _
    $region13: #{tpu_custom_call.1} parent=1 // pred_fallthru
      _
    // Predicated region
    $region14: #{tpu_custom_call.1} parent=1 // pred_check
      _
    $region15: #{tpu_custom_call.1} parent=1 // pred_check_branch
      %36 = sbr.rel (0) target = $region17
    $region16: #{tpu_custom_call.1} parent=1 // pred_region
      %37 = dma.done [#allocation3], 128
    $region17: #{tpu_custom_call.1} parent=1 // pred_fallthru
      _
    // Predicated region
    $region18: #{tpu_custom_call.1} parent=1 // pred_check
      _
    $region19: #{tpu_custom_call.1} parent=1 // pred_check_branch
      %39 = sbr.rel (0) target = $region21
    $region20: #{tpu_custom_call.1} parent=1 // pred_region
      %40 = dma.done [#allocation6], 2048
    $region21: #{tpu_custom_call.1} parent=1 // pred_fallthru
      _
    %v41 = vld [vmem:[#allocation2] sm:$0xff]
    %v42 = vld [vmem:[#allocation5] sm:$0xff]
    %v43 = vld [vmem:[#allocation5 + $0x8] sm:$0xff]
    %v44 = vld [vmem:[#allocation5 + $0x10] sm:$0xff]
    %v45 = vld [vmem:[#allocation5 + $0x18] sm:$0xff]
    %v46 = vld [vmem:[#allocation5 + $0x20] sm:$0xff]
    %v47 = vld [vmem:[#allocation5 + $0x28] sm:$0xff]
    %v48 = vld [vmem:[#allocation5 + $0x30] sm:$0xff]
    %v49 = vld [vmem:[#allocation5 + $0x38] sm:$0xff]
    %v50 = vld [vmem:[#allocation5 + $0x40] sm:$0xff]
    %v51 = vld [vmem:[#allocation5 + $0x48] sm:$0xff]
    %v52 = vld [vmem:[#allocation5 + $0x50] sm:$0xff]
    %v53 = vld [vmem:[#allocation5 + $0x58] sm:$0xff]
    %v54 = vld [vmem:[#allocation5 + $0x60] sm:$0xff]
    %v55 = vld [vmem:[#allocation5 + $0x68] sm:$0xff]
    %v56 = vld [vmem:[#allocation5 + $0x70] sm:$0xff]
    %v57 = vld [vmem:[#allocation5 + $0x78] sm:$0xff]
    %v58 = vld [vmem:[%s2] sm:$0x1]
    %v60 = vlaneseq
    %v61 = vshrl.u32 %v60, 7
    %v62 = vsub.s32 0, %v61
    %v63 = vrot.slane %v58, %v62
    %65 = vmatprep.subr.mxu0 0.0
    %66 = vmatpush1.xpose.msra.mxu0 %v57
    %67 = vmatprep.subr.mxu0 0.0
    %68 = vmatpush1.xpose.msra.mxu0 %v56
    %69 = vmatprep.subr.mxu0 0.0
    %70 = vmatpush1.xpose.msra.mxu0 %v55
    %71 = vmatprep.subr.mxu0 0.0
    %72 = vmatpush1.xpose.msra.mxu0 %v54
    %73 = vmatprep.subr.mxu0 0.0
    %74 = vmatpush1.xpose.msra.mxu0 %v53
    %75 = vmatprep.subr.mxu0 0.0
    %76 = vmatpush1.xpose.msra.mxu0 %v52
    %77 = vmatprep.subr.mxu0 0.0
    %78 = vmatpush1.xpose.msra.mxu0 %v51
    %79 = vmatprep.subr.mxu0 0.0
    %80 = vmatpush1.xpose.msra.mxu0 %v50
    %81 = vmatprep.subr.mxu0 0.0
    %82 = vmatpush1.xpose.msra.mxu0 %v49
    %83 = vmatprep.subr.mxu0 0.0
    %84 = vmatpush1.xpose.msra.mxu0 %v48
    %85 = vmatprep.subr.mxu0 0.0
    %86 = vmatpush1.xpose.msra.mxu0 %v47
    %87 = vmatprep.subr.mxu0 0.0
    %88 = vmatpush1.xpose.msra.mxu0 %v46
    %89 = vmatprep.subr.mxu0 0.0
    %90 = vmatpush1.xpose.msra.mxu0 %v45
    %91 = vmatprep.subr.mxu0 0.0
    %92 = vmatpush1.xpose.msra.mxu0 %v44
    %93 = vmatprep.subr.mxu0 0.0
    %94 = vmatpush1.xpose.msra.mxu0 %v43
    %95 = vmatprep.subr.mxu0 0.0
    %96 = vmatpush1.xpose.msra.mxu0 %v42
    %97 = vmatprep.subr.mxu0 0.0
    %98 = vmatpush2.xpose.msra.mxu0 0.0
    %99 = vmatprep.subr.mxu0 0.0
    %100 = vmatpush2.xpose.msra.mxu0 0.0
    %101 = vmatprep.subr.mxu0 0.0
    %102 = vmatpush2.xpose.msra.mxu0 0.0
    %103 = vmatprep.subr.mxu0 0.0
    %104 = vmatpush2.xpose.msra.mxu0 0.0
    %105 = vmatprep.subr.mxu0 0.0
    %106 = vmatpush2.xpose.msra.mxu0 0.0
    %107 = vmatprep.subr.mxu0 0.0
    %108 = vmatpush2.xpose.msra.mxu0 0.0
    %109 = vmatprep.subr.mxu0 0.0
    %110 = vmatpush2.xpose.msra.mxu0 0.0
    %111 = vmatprep.subr.mxu0 0.0
    %112 = vmatpush2.xpose.msra.mxu0 0.0
    %113 = vmatprep.subr.mxu0 0.0
    %114 = vmatpush2.xpose.msra.mxu0 0.0
    %115 = vmatprep.subr.mxu0 0.0
    %116 = vmatpush2.xpose.msra.mxu0 0.0
    %117 = vmatprep.subr.mxu0 0.0
    %118 = vmatpush2.xpose.msra.mxu0 0.0
    %119 = vmatprep.subr.mxu0 0.0
    %120 = vmatpush2.xpose.msra.mxu0 0.0
    %121 = vmatprep.subr.mxu0 0.0
    %122 = vmatpush2.xpose.msra.mxu0 0.0
    %123 = vmatprep.subr.mxu0 0.0
    %124 = vmatpush2.xpose.msra.mxu0 0.0
    %125 = vmatprep.subr.mxu0 0.0
    %126 = vmatpush2.xpose.msra.mxu0 0.0
    %127 = vmatprep.subr.mxu0 0.0
    %128 = vmatpush2.xpose.msra.mxu0 0.0
    %129 = vmatprep.mubr.f32.mxu0 0.0
    %130 = vmatmul.mubr.f32.gmra.mxu0 %v41
    %v131 = vpop.f32.mrf.mxu0
    %v132 = vadd.f32 %v63, %v131
    %v133 = vpop.f32.mrf.mxu0
    %134 = vdwg.mxu0
    %135 = vst [vmem:[#allocation7] sm:$0xff] %v132
    // Predicated region
    $region22: #{tpu_custom_call.1} parent=1 // pred_check
      _
    $region23: #{tpu_custom_call.1} parent=1 // pred_check_branch
      %137 = sbr.rel (0) target = $region25
    $region24: #{tpu_custom_call.1} parent=1 // pred_region
      %s139 = ssub.s32 128, 128
      %140 = vsyncadd [#allocation4], %s139
      %s142 = sshll.u32 [#allocation7], 4
      %s143 = int_to_ptr.vmem [resolvable:$true] %s142
      %145 = dma.vmem_to_hbm [thread:$0]  %s143, 128, %s3, [#allocation4]
    $region25: #{tpu_custom_call.1} parent=1 // pred_fallthru
      _
    // Predicated region
    $region26: #{tpu_custom_call.1} parent=1 // pred_check
      _
    $region27: #{tpu_custom_call.1} parent=1 // pred_check_branch
      %147 = sbr.rel (0) target = $region29
    $region28: #{tpu_custom_call.1} parent=1 // pred_region
      %148 = dma.done [#allocation4], 128
    $region29: #{tpu_custom_call.1} parent=1 // pred_fallthru
      _
    %149 = vsyncpa [#allocation3], 1
    %150 = vsyncpa [#allocation6], 1
    %151 = vsyncpa [#allocation4], 1

</llo_original>
